<compile_context>
chip_gen: v7x
topology: tpu7x:2x2x1
jax: 0.10.0
libtpu: 0.0.40
codegen_flags: <defaults>
</compile_context>

<pallas_src>
import jax
import jax.numpy as jnp
from jax import lax
from jax.experimental import pallas as pl
from jax.experimental.pallas import tpu as pltpu

_LANE = 128
_EPS = 1e-5
_SOFTPLUS_THRESHOLD = 20.0


def dense_layer_kernel(x_ref, w_ref, gamma_ref, beta_ref, o_ref):
    # x:     (N, in_f)   resident across the grid
    # w:     (TN, in_f)  tile of the (out, in) PyTorch-layout weight
    # gamma: (1, TN)     BN weight tile
    # beta:  (1, TN)     BN bias tile
    x = x_ref[...]
    w = w_ref[...]

    # (N, in) . (TN, in) contracted on `in` -> (N, TN). Native dtypes feed the
    # MXU (bf16 stays bf16), f32 accumulation. No transpose materialized.
    y = lax.dot_general(
        x, w, (((1,), (1,)), ((), ())), preferred_element_type=jnp.float32
    )

    # Train-mode BatchNorm1d over the batch axis, single pass (sum / sum-sq).
    # The Linear bias is a per-feature constant and cancels exactly in
    # (y - mean), so it was removed from the kernel entirely.
    inv_n = jnp.float32(1.0 / y.shape[0])
    mean = jnp.sum(y, axis=0, keepdims=True) * inv_n
    ex2 = jnp.sum(y * y, axis=0, keepdims=True) * inv_n
    var = ex2 - mean * mean

    # Fold BN affine into a single per-feature scale/shift (mul + add per elem).
    scale = gamma_ref[...] * lax.rsqrt(var + _EPS)        # rsqrt -> EUP
    shift = beta_ref[...] - mean * scale
    y_hat = y * scale + shift

    # Softplus matching torch.nn.Softplus (beta=1, threshold=20).
    sp = jnp.where(
        y_hat > _SOFTPLUS_THRESHOLD,
        y_hat,
        jnp.log1p(jnp.exp(jnp.minimum(y_hat, _SOFTPLUS_THRESHOLD))),
    )
    o_ref[...] = sp.astype(o_ref.dtype)


def dense_layer(fea, w, b, gamma, beta):
    """Fused Linear -> BatchNorm1d (train mode) -> Softplus.

    fea:   (N, in_f)
    w:     (out_f, in_f)  PyTorch nn.Linear layout (used as-is, no transpose)
    b:     (out_f,)       accepted for API parity; mathematically cancels in BN
    gamma: (out_f,)       BatchNorm1d weight
    beta:  (out_f,)       BatchNorm1d bias
    """
    del b  # exact no-op under train-mode BatchNorm (cancels in y - batch_mean)

    n, in_f = fea.shape
    out_f = w.shape[0]

    # Lane-dense feature axis: pad out_f up to a multiple of 128.
    # (In a real model this padding would be done once at parameter-init time.)
    out_pad = -(-out_f // _LANE) * _LANE
    if out_pad != out_f:
        pad = out_pad - out_f
        w = jnp.pad(w, ((0, pad), (0, 0)))
        gamma = jnp.pad(gamma, (0, pad))
        beta = jnp.pad(beta, (0, pad))

    g2 = gamma.reshape(1, out_pad).astype(jnp.float32)
    be2 = beta.reshape(1, out_pad).astype(jnp.float32)

    # Feature tile: 256 fills the v6e/v7x 256-wide MXU when divisible, else 128
    # (v5e MXU granularity / small out_f). Tiles are independent -> parallel grid.
    tn = 256 if out_pad % 256 == 0 else _LANE
    grid = (out_pad // tn,)

    # VMEM budget: double-buffered w/out/gamma/beta tiles + resident x, with
    # headroom, clamped under v7x's 64 MiB physical VMEM.
    x_bytes = jnp.dtype(fea.dtype).itemsize
    per_step = (
        n * in_f * x_bytes                       # x (resident)
        + tn * in_f * jnp.dtype(w.dtype).itemsize  # w tile
        + n * tn * x_bytes                       # out tile
        + 2 * tn * 4                             # gamma/beta tiles
    )
    vmem_limit = int(min(max(4 * per_step + (2 << 20), 8 << 20), 60 << 20))

    out = pl.pallas_call(
        dense_layer_kernel,
        out_shape=jax.ShapeDtypeStruct((n, out_pad), fea.dtype),
        grid_spec=pltpu.PrefetchScalarGridSpec(
            num_scalar_prefetch=0,
            grid=grid,
            in_specs=[
                pl.BlockSpec((n, in_f), lambda j: (0, 0)),    # x (resident)
                pl.BlockSpec((tn, in_f), lambda j: (j, 0)),   # weight tile
                pl.BlockSpec((1, tn), lambda j: (0, j)),      # gamma tile
                pl.BlockSpec((1, tn), lambda j: (0, j)),      # beta tile
            ],
            out_specs=pl.BlockSpec((n, tn), lambda j: (0, j)),
        ),
        compiler_params=pltpu.CompilerParams(
            dimension_semantics=("parallel",),   # shards tiles across TCs on v7x
            vmem_limit_bytes=vmem_limit,
        ),
    )(fea, w, g2, be2)

    if out_pad != out_f:
        out = out[:, :out_f]
    return out


def reference(fea, w, b, gamma, beta):
    # Pure-JAX reference with the bias INCLUDED, to verify the cancellation.
    y = fea @ w.T + b
    mean = jnp.mean(y, axis=0, keepdims=True)
    var = jnp.mean((y - mean) ** 2, axis=0, keepdims=True)
    y = (y - mean) / jnp.sqrt(var + _EPS) * gamma + beta
    return jnp.where(y > 20.0, y, jnp.log1p(jnp.exp(jnp.minimum(y, 20.0))))


if __name__ == "__main__":
    in_fea_len = 32
    out_fea_len = 32
    batch = 8

    key = jax.random.PRNGKey(0)
    k_x, k_w, k_b, k_g, k_be = jax.random.split(key, 5)

    fea = jax.random.normal(k_x, (batch, in_fea_len), dtype=jnp.float32)
    bound = 1.0 / (in_fea_len ** 0.5)
    w = jax.random.uniform(k_w, (out_fea_len, in_fea_len),
                           minval=-bound, maxval=bound, dtype=jnp.float32)
    b = jax.random.uniform(k_b, (out_fea_len,),
                           minval=-bound, maxval=bound, dtype=jnp.float32)
    gamma = 1.0 + 0.1 * jax.random.normal(k_g, (out_fea_len,), dtype=jnp.float32)
    beta = 0.1 * jax.random.normal(k_be, (out_fea_len,), dtype=jnp.float32)

    out = dense_layer(fea, w, b, gamma, beta)
    jax.block_until_ready(out)

    ref = reference(fea, w, b, gamma, beta)
    assert out.shape == (batch, out_fea_len)
    assert jnp.allclose(out, ref, atol=1e-4, rtol=1e-4)

    print("KERNEL_OK")
</pallas_src>

<mosaic_0001>
module attributes {stable_mosaic.version = 11 : i64} {
  func.func @dense_layer_kernel(%arg0: i32, %arg1: memref<8x32xf32, #tpu.memory_space<vmem>>, %arg2: memref<128x32xf32, #tpu.memory_space<vmem>>, %arg3: memref<1x128xf32, #tpu.memory_space<vmem>>, %arg4: memref<1x128xf32, #tpu.memory_space<vmem>>, %arg5: memref<8x128xf32, #tpu.memory_space<vmem>>) attributes {dimension_semantics = [#tpu.dimension_semantics<parallel>], iteration_bounds = array<i64: 1>, scalar_prefetch = 0 : i64, scratch_operands = 0 : i64, tpu.core_type = #tpu.core_type<tc>, window_params = [{pipeline_mode = #tpu.pipeline_mode<synchronous>, transform_indices = @transform_0, window_bounds = array<i64: 8, 32>}, {transform_indices = @transform_1, window_bounds = array<i64: 128, 32>}, {transform_indices = @transform_2, window_bounds = array<i64: 1, 128>}, {transform_indices = @transform_3, window_bounds = array<i64: 1, 128>}, {transform_indices = @transform_4, window_bounds = array<i64: 8, 128>}]} {
    %c0 = arith.constant 0 : index
    %c0_0 = arith.constant 0 : index
    %0 = vector.load %arg1[%c0, %c0_0] : memref<8x32xf32, #tpu.memory_space<vmem>>, vector<8x32xf32>
    %c0_1 = arith.constant 0 : index
    %c0_2 = arith.constant 0 : index
    %1 = vector.load %arg2[%c0_1, %c0_2] : memref<128x32xf32, #tpu.memory_space<vmem>>, vector<128x32xf32>
    %cst = arith.constant dense<0.000000e+00> : vector<8x128xf32>
    %2 = tpu.matmul %0, %1, %cst {dimension_numbers = #tpu.dot_dimension_numbers<[1], [1], [0], [0], [0, 0, 1, 0], [], []>} : vector<8x32xf32>, vector<128x32xf32>, vector<8x128xf32> -> vector<8x128xf32>
    %cst_3 = arith.constant dense<0.000000e+00> : vector<128xf32>
    %3 = vector.multi_reduction <add>, %2, %cst_3 [0] : vector<8x128xf32> to vector<128xf32>
    %4 = vector.shape_cast %3 : vector<128xf32> to vector<1x128xf32>
    %cst_4 = arith.constant 1.250000e-01 : f32
    %5 = vector.broadcast %cst_4 : f32 to vector<1x128xf32>
    %6 = arith.mulf %4, %5 : vector<1x128xf32>
    %7 = arith.mulf %2, %2 : vector<8x128xf32>
    %cst_5 = arith.constant dense<0.000000e+00> : vector<128xf32>
    %8 = vector.multi_reduction <add>, %7, %cst_5 [0] : vector<8x128xf32> to vector<128xf32>
    %9 = vector.shape_cast %8 : vector<128xf32> to vector<1x128xf32>
    %cst_6 = arith.constant 1.250000e-01 : f32
    %10 = vector.broadcast %cst_6 : f32 to vector<1x128xf32>
    %11 = arith.mulf %9, %10 : vector<1x128xf32>
    %12 = arith.mulf %6, %6 : vector<1x128xf32>
    %13 = arith.subf %11, %12 : vector<1x128xf32>
    %c0_7 = arith.constant 0 : index
    %c0_8 = arith.constant 0 : index
    %14 = vector.load %arg3[%c0_7, %c0_8] : memref<1x128xf32, #tpu.memory_space<vmem>>, vector<1x128xf32>
    %cst_9 = arith.constant 9.99999974E-6 : f32
    %15 = vector.broadcast %cst_9 : f32 to vector<1x128xf32>
    %16 = arith.addf %13, %15 : vector<1x128xf32>
    %17 = math.rsqrt %16 : vector<1x128xf32>
    %18 = arith.mulf %14, %17 : vector<1x128xf32>
    %c0_10 = arith.constant 0 : index
    %c0_11 = arith.constant 0 : index
    %19 = vector.load %arg4[%c0_10, %c0_11] : memref<1x128xf32, #tpu.memory_space<vmem>>, vector<1x128xf32>
    %20 = arith.mulf %6, %18 : vector<1x128xf32>
    %21 = arith.subf %19, %20 : vector<1x128xf32>
    %22 = vector.broadcast %18 : vector<1x128xf32> to vector<8x128xf32>
    %23 = arith.mulf %2, %22 : vector<8x128xf32>
    %24 = vector.broadcast %21 : vector<1x128xf32> to vector<8x128xf32>
    %25 = arith.addf %23, %24 : vector<8x128xf32>
    %cst_12 = arith.constant 2.000000e+01 : f32
    %26 = vector.broadcast %cst_12 : f32 to vector<8x128xf32>
    %27 = arith.cmpf ogt, %25, %26 : vector<8x128xf32>
    %cst_13 = arith.constant 2.000000e+01 : f32
    %28 = vector.broadcast %cst_13 : f32 to vector<8x128xf32>
    %29 = arith.minimumf %25, %28 : vector<8x128xf32>
    %30 = math.exp %29 : vector<8x128xf32>
    %31 = math.log1p %30 : vector<8x128xf32>
    %32 = arith.select %27, %25, %31 : vector<8x128xi1>, vector<8x128xf32>
    %c0_14 = arith.constant 0 : index
    %c0_15 = arith.constant 0 : index
    %33 = vector.load %arg5[%c0_14, %c0_15] : memref<8x128xf32, #tpu.memory_space<vmem>>, vector<8x128xf32>
    tpu.vector_store %arg5[%c0_14, %c0_15], %32 {strides = array<i32>} : memref<8x128xf32, #tpu.memory_space<vmem>>, vector<8x128xf32>,
    return
  }
  func.func @transform_0(%arg0: i32) -> (i32, i32) {
    %c0_i32 = arith.constant 0 : i32
    %c0_i32_0 = arith.constant 0 : i32
    %c0_i32_1 = arith.constant 0 : i32
    return %c0_i32, %c0_i32_0 : i32, i32
  }
  func.func @transform_1(%arg0: i32) -> (i32, i32) {
    %c0_i32 = arith.constant 0 : i32
    %c0_i32_0 = arith.constant 0 : i32
    return %arg0, %c0_i32 : i32, i32
  }
  func.func @transform_2(%arg0: i32) -> (i32, i32) {
    %c0_i32 = arith.constant 0 : i32
    %c0_i32_0 = arith.constant 0 : i32
    return %c0_i32, %arg0 : i32, i32
  }
  func.func @transform_3(%arg0: i32) -> (i32, i32) {
    %c0_i32 = arith.constant 0 : i32
    %c0_i32_0 = arith.constant 0 : i32
    return %c0_i32, %arg0 : i32, i32
  }
  func.func @transform_4(%arg0: i32) -> (i32, i32) {
    %c0_i32 = arith.constant 0 : i32
    %c0_i32_0 = arith.constant 0 : i32
    return %c0_i32, %arg0 : i32, i32
  }
}

</mosaic_0001>

<llo_original>
// kernel: tpu_custom_call.1
$region0: #{tpu_custom_call.1}
  #allocation0 [shape = 'u32[]', space=smem, size = 0x4, offset = 0x4, fixed_abs, tag = 'smem constant byte address 0x4 - core index']
  #allocation1 [shape = 'u32[144,128]{1,0:T(1,128)}', space=vmem, size = 0x12000, scoped, tag = 'internal scratch']
  %s0 = inlined_call_operand.vmem [shape: f32[8,32], index: 0, kind: input, shape index: {}]
  %s1 = inlined_call_operand.vmem [shape: f32[128,32], index: 1, kind: input, shape index: {}]
  %s2 = inlined_call_operand.vmem [shape: f32[1,128], index: 2, kind: input, shape index: {}]
  %s3 = inlined_call_operand.vmem [shape: f32[1,128], index: 3, kind: input, shape index: {}]
  %s4 = inlined_call_operand.hbm [shape: f32[8,128], index: 4, kind: output, shape index: {}]
  %s5 = sld [smem:[#allocation0]]
  $region26: #{tpu_custom_call.1} parent=0
    _
  %s7 = ssub.s32 1, %s5
  %s8 = scalar_select 0, %s7, %s5
  $region1: #{tpu_custom_call.1} parent=0
    #allocation2 [shape = 'u8[4096]{0}', space=vmem, size = 0x1000, scoped, tag = 'output window, operand 0, single buffered']
    #allocation3 [shape = 's32[1]{0}', space=sflag, size = 0x4, scoped, tag = 'scoped memory for tpu_custom_call.1']
    %9 = vsyncpa [#allocation3], 0
    // Predicated region
    $region2: #{tpu_custom_call.1} parent=1 // pred_check
      _
    $region3: #{tpu_custom_call.1} parent=1 // pred_check_branch
      %11 = sbr.rel (0) target = $region5
    $region4: #{tpu_custom_call.1} parent=1 // pred_region
      _
    $region5: #{tpu_custom_call.1} parent=1 // pred_fallthru
      _
    // Predicated region
    $region6: #{tpu_custom_call.1} parent=1 // pred_check
      _
    $region7: #{tpu_custom_call.1} parent=1 // pred_check_branch
      %13 = sbr.rel (0) target = $region9
    $region8: #{tpu_custom_call.1} parent=1 // pred_region
      _
    $region9: #{tpu_custom_call.1} parent=1 // pred_fallthru
      _
    // Predicated region
    $region10: #{tpu_custom_call.1} parent=1 // pred_check
      _
    $region11: #{tpu_custom_call.1} parent=1 // pred_check_branch
      %15 = sbr.rel (0) target = $region13
    $region12: #{tpu_custom_call.1} parent=1 // pred_region
      _
    $region13: #{tpu_custom_call.1} parent=1 // pred_fallthru
      _
    // Predicated region
    $region14: #{tpu_custom_call.1} parent=1 // pred_check
      _
    $region15: #{tpu_custom_call.1} parent=1 // pred_check_branch
      %17 = sbr.rel (0) target = $region17
    $region16: #{tpu_custom_call.1} parent=1 // pred_region
      _
    $region17: #{tpu_custom_call.1} parent=1 // pred_fallthru
      _
    %v18 = vld [vmem:[%s0] sm:$0xff]
    %v19 = vld [vmem:[%s1] sm:$0xff]
    %v20 = vld [vmem:[%s1 + $0x8] sm:$0xff]
    %v21 = vld [vmem:[%s1 + $0x10] sm:$0xff]
    %v22 = vld [vmem:[%s1 + $0x18] sm:$0xff]
    %v23 = vld [vmem:[%s1 + $0x20] sm:$0xff]
    %v24 = vld [vmem:[%s1 + $0x28] sm:$0xff]
    %v25 = vld [vmem:[%s1 + $0x30] sm:$0xff]
    %v26 = vld [vmem:[%s1 + $0x38] sm:$0xff]
    %v27 = vld [vmem:[%s1 + $0x40] sm:$0xff]
    %v28 = vld [vmem:[%s1 + $0x48] sm:$0xff]
    %v29 = vld [vmem:[%s1 + $0x50] sm:$0xff]
    %v30 = vld [vmem:[%s1 + $0x58] sm:$0xff]
    %v31 = vld [vmem:[%s1 + $0x60] sm:$0xff]
    %v32 = vld [vmem:[%s1 + $0x68] sm:$0xff]
    %v33 = vld [vmem:[%s1 + $0x70] sm:$0xff]
    %v34 = vld [vmem:[%s1 + $0x78] sm:$0xff]
    %vm35 = vcmask 261120
    %v37 = vsel %vm35, %v18, 0
    %v40 = vsel %vm35, %v19, 0
    %v43 = vsel %vm35, %v20, 0
    %v46 = vsel %vm35, %v21, 0
    %v49 = vsel %vm35, %v22, 0
    %v52 = vsel %vm35, %v23, 0
    %v55 = vsel %vm35, %v24, 0
    %v58 = vsel %vm35, %v25, 0
    %v61 = vsel %vm35, %v26, 0
    %v64 = vsel %vm35, %v27, 0
    %v67 = vsel %vm35, %v28, 0
    %v70 = vsel %vm35, %v29, 0
    %v73 = vsel %vm35, %v30, 0
    %v76 = vsel %vm35, %v31, 0
    %v79 = vsel %vm35, %v32, 0
    %v82 = vsel %vm35, %v33, 0
    %v85 = vsel %vm35, %v34, 0
    %87 = vmatprep.subr.mxu0 0.0
    %88 = vmatpush1.xpose.msra.mxu0 %v40
    %89 = vmatprep.subr.mxu0 0.0
    %90 = vmatpush1.xpose.msra.mxu0 %v43
    %91 = vmatprep.subr.mxu0 0.0
    %92 = vmatpush1.xpose.msra.mxu0 %v46
    %93 = vmatprep.subr.mxu0 0.0
    %94 = vmatpush1.xpose.msra.mxu0 %v49
    %95 = vmatprep.subr.mxu0 0.0
    %96 = vmatpush1.xpose.msra.mxu0 %v52
    %97 = vmatprep.subr.mxu0 0.0
    %98 = vmatpush1.xpose.msra.mxu0 %v55
    %99 = vmatprep.subr.mxu0 0.0
    %100 = vmatpush1.xpose.msra.mxu0 %v58
    %101 = vmatprep.subr.mxu0 0.0
    %102 = vmatpush1.xpose.msra.mxu0 %v61
    %103 = vmatprep.subr.mxu0 0.0
    %104 = vmatpush1.xpose.msra.mxu0 %v64
    %105 = vmatprep.subr.mxu0 0.0
    %106 = vmatpush1.xpose.msra.mxu0 %v67
    %107 = vmatprep.subr.mxu0 0.0
    %108 = vmatpush1.xpose.msra.mxu0 %v70
    %109 = vmatprep.subr.mxu0 0.0
    %110 = vmatpush1.xpose.msra.mxu0 %v73
    %111 = vmatprep.subr.mxu0 0.0
    %112 = vmatpush1.xpose.msra.mxu0 %v76
    %113 = vmatprep.subr.mxu0 0.0
    %114 = vmatpush1.xpose.msra.mxu0 %v79
    %115 = vmatprep.subr.mxu0 0.0
    %116 = vmatpush1.xpose.msra.mxu0 %v82
    %117 = vmatprep.subr.mxu0 0.0
    %118 = vmatpush1.xpose.msra.mxu0 %v85
    %119 = vmatprep.subr.mxu0 0.0
    %120 = vmatpush1.xpose.msra.mxu0 0.0
    %121 = vmatprep.subr.mxu0 0.0
    %122 = vmatpush1.xpose.msra.mxu0 0.0
    %123 = vmatprep.subr.mxu0 0.0
    %124 = vmatpush1.xpose.msra.mxu0 0.0
    %125 = vmatprep.subr.mxu0 0.0
    %126 = vmatpush1.xpose.msra.mxu0 0.0
    %127 = vmatprep.subr.mxu0 0.0
    %128 = vmatpush1.xpose.msra.mxu0 0.0
    %129 = vmatprep.subr.mxu0 0.0
    %130 = vmatpush1.xpose.msra.mxu0 0.0
    %131 = vmatprep.subr.mxu0 0.0
    %132 = vmatpush1.xpose.msra.mxu0 0.0
    %133 = vmatprep.subr.mxu0 0.0
    %134 = vmatpush1.xpose.msra.mxu0 0.0
    %135 = vmatprep.subr.mxu0 0.0
    %136 = vmatpush1.xpose.msra.mxu0 0.0
    %137 = vmatprep.subr.mxu0 0.0
    %138 = vmatpush1.xpose.msra.mxu0 0.0
    %139 = vmatprep.subr.mxu0 0.0
    %140 = vmatpush1.xpose.msra.mxu0 0.0
    %141 = vmatprep.subr.mxu0 0.0
    %142 = vmatpush1.xpose.msra.mxu0 0.0
    %143 = vmatprep.subr.mxu0 0.0
    %144 = vmatpush1.xpose.msra.mxu0 0.0
    %145 = vmatprep.subr.mxu0 0.0
    %146 = vmatpush1.xpose.msra.mxu0 0.0
    %147 = vmatprep.subr.mxu0 0.0
    %148 = vmatpush1.xpose.msra.mxu0 0.0
    %149 = vmatprep.subr.mxu0 0.0
    %150 = vmatpush1.xpose.msra.mxu0 0.0
    %151 = vmatprep.mubr.f32.mxu0 0.0
    %152 = vmatmul.mubr.f32.gmra.mrb[0].mxu0 %v37
    %v153 = vpop.f32.mrb[0].mxu0
    %v154 = vadd.f32 0.0, %v153
    %v155 = vpop.f32.mrb[0].mxu0
    %156 = vdwg.mxu0
    %v157 = vrot.slane %v154, 4
    %v158 = vadd.f32 %v154, %v157
    %v159 = vrot.slane %v158, 2
    %v160 = vadd.f32 %v158, %v159
    %v161 = vrot.slane %v160, 1
    %v162 = vadd.f32 %v160, %v161
    %v163 = vmul.f32 %v162, 0.125
    %v164 = vmul.f32 %v154, %v154
    %v165 = vrot.slane %v164, 4
    %v166 = vadd.f32 %v164, %v165
    %v167 = vrot.slane %v166, 2
    %v168 = vadd.f32 %v166, %v167
    %v169 = vrot.slane %v168, 1
    %v170 = vadd.f32 %v168, %v169
    %v171 = vmul.f32 %v170, 0.125
    %v172 = vmul.f32 %v163, %v163
    %v173 = vsub.f32 %v171, %v172
    %v174 = vld [vmem:[%s2] sm:$0x1]
    %v175 = vadd.f32 %v173, 1e-05
    %v176 = vrsqrt.pop %v175
    %v177 = vmul.f32 %v174, %v176
    %v178 = vld [vmem:[%s3] sm:$0x1]
    %v179 = vmul.f32 %v163, %v177
    %v180 = vsub.f32 %v178, %v179
    %v182 = vlaneseq
    %v183 = vshrl.u32 %v182, 7
    %v184 = vsub.s32 0, %v183
    %v185 = vrot.slane %v177, %v184
    %v187 = vmul.f32 %v154, %v185
    %v189 = vlaneseq
    %v190 = vshrl.u32 %v189, 7
    %v191 = vsub.s32 0, %v190
    %v192 = vrot.slane %v180, %v191
    %v194 = vadd.f32 %v187, %v192
    %vm195 = vcmp.gt.f32.partialorder %v194, 20.0
    %v196 = vmin.f32 %v194, 20.0
    %v197 = vmul.f32 %v196, 1.442695
    %v198 = vpow.pop %v197
    %v199 = vadd.f32 %v198, 1.0
    %v200 = vlog2.pop %v199
    %v201 = vmul.f32 %v200, 0.6931472
    %v202 = vmul.f32 -0.5, %v198
    %v203 = vadd.f32 %v202, 1.0
    %v204 = vmul.f32 %v203, %v198
    %v205 = vand.u32 2147483647, %v198
    %vm206 = vcmp.lt.f32.partialorder %v205, 0.0004427343
    %v207 = vsel %vm206, %v204, %v201
    %v208 = vsel %vm195, %v194, %v207
    %209 = vst [vmem:[#allocation2] sm:$0xff] %v208
    // Predicated region
    $region18: #{tpu_custom_call.1} parent=1 // pred_check
      _
    $region19: #{tpu_custom_call.1} parent=1 // pred_check_branch
      %211 = sbr.rel (0) target = $region21
    $region20: #{tpu_custom_call.1} parent=1 // pred_region
      %s213 = ssub.s32 128, 128
      %214 = vsyncadd [#allocation3], %s213
      %s216 = sshll.u32 [#allocation2], 4
      %s217 = int_to_ptr.vmem [resolvable:$true] %s216
      %219 = dma.vmem_to_hbm [thread:$0]  %s217, 128, %s4, [#allocation3]
    $region21: #{tpu_custom_call.1} parent=1 // pred_fallthru
      _
    // Predicated region
    $region22: #{tpu_custom_call.1} parent=1 // pred_check
      _
    $region23: #{tpu_custom_call.1} parent=1 // pred_check_branch
      %221 = sbr.rel (0) target = $region25
    $region24: #{tpu_custom_call.1} parent=1 // pred_region
      %222 = dma.done [#allocation3], 128
    $region25: #{tpu_custom_call.1} parent=1 // pred_fallthru
      _
    %223 = vsyncpa [#allocation3], 1

</llo_original>
